<compile_context>
chip_gen: v5e
topology: v5e:2x2
jax: 0.10.0
libtpu: 0.0.40
codegen_flags: <defaults>
</compile_context>

<pallas_src>
import jax
import jax.numpy as jnp
from jax.experimental import pallas as pl
from jax.experimental.pallas import tpu as pltpu


_LANES = 1024                 # lane-dense last dim (multiple of 128)
_ROW_PAD = 16                 # row-count multiple (covers f32 sublane=8, bf16 sublane=16)
_TILE_BYTES = 2 << 20         # ~2 MiB per tile regardless of dtype
_PALLAS_MIN_BYTES = 1 << 20   # below this, plain jnp.round is faster than a kernel launch


def _round_kernel(x_ref, o_ref):
    # Elementwise round-to-nearest-even (matches torch.round / jnp.round).
    o_ref[...] = jnp.round(x_ref[...])


def _tile_rows(rows: int, itemsize: int) -> int:
    """Rows per tile: ~_TILE_BYTES per tile, multiple of _ROW_PAD, <= rows."""
    tm = (_TILE_BYTES // (_LANES * itemsize)) // _ROW_PAD * _ROW_PAD
    tm = max(_ROW_PAD, tm)
    return min(tm, rows)


def _round_pallas_2d(x2: jax.Array) -> jax.Array:
    """Tiled, pipelined elementwise round on a lane-dense 2D slab."""
    rows, cols = x2.shape
    tm = _tile_rows(rows, x2.dtype.itemsize)  # rows is a multiple of _ROW_PAD
    grid = (pl.cdiv(rows, tm),)
    return pl.pallas_call(
        _round_kernel,
        out_shape=jax.ShapeDtypeStruct((rows, cols), x2.dtype),
        grid_spec=pl.GridSpec(
            grid=grid,
            in_specs=[pl.BlockSpec((tm, cols), lambda i: (i, 0))],
            out_specs=pl.BlockSpec((tm, cols), lambda i: (i, 0)),
        ),
        # Round never needs the original values afterward -> write in place.
        input_output_aliases={0: 0},
        compiler_params=pltpu.CompilerParams(
            dimension_semantics=("parallel",),
            vmem_limit_bytes=32 << 20,
        ),
    )(x2)


def differentiable_quantize_fwd(x: jax.Array, *, force_pallas: bool = False) -> jax.Array:
    """Forward of DifferentiableQuantize: elementwise round."""
    orig_shape = x.shape
    total = x.size
    if total == 0:
        return x

    # Tiny tensors: kernel launch + DMA setup dominates; XLA's fused round wins.
    if (not force_pallas) and total * x.dtype.itemsize < _PALLAS_MIN_BYTES:
        return jnp.round(x)

    # Flatten fully and pad so we can present a lane-dense (rows, _LANES) slab
    # with rows a multiple of the sublane tile.
    flat = x.reshape(-1)
    chunk = _ROW_PAD * _LANES
    padded_total = ((total + chunk - 1) // chunk) * chunk
    if padded_total != total:
        flat = jnp.pad(flat, (0, padded_total - total))
    x2 = flat.reshape(padded_total // _LANES, _LANES)

    out2 = _round_pallas_2d(x2)
    out_flat = out2.reshape(-1)
    if padded_total != total:
        out_flat = out_flat[:total]
    return out_flat.reshape(orig_shape)


# Straight-through estimator mirroring differentiable_quantize.backward
# (identity gradient). Forward path is the Pallas kernel above.
@jax.custom_vjp
def differentiable_quantize(x):
    return differentiable_quantize_fwd(x)


def _dq_fwd(x):
    return differentiable_quantize_fwd(x), None


def _dq_bwd(_, g):
    return (g,)


differentiable_quantize.defvjp(_dq_fwd, _dq_bwd)


if __name__ == "__main__":
    key = jax.random.PRNGKey(0)
    # Shapes consistent with a DiffJPEG-style input: (N, C, H, W)
    x = jax.random.uniform(key, (2, 4, 16, 16), dtype=jnp.float32,
                           minval=-10.0, maxval=10.0)

    # 1) Exercise the Pallas kernel path explicitly (small shape gets padded to
    #    a lane-dense slab; normal-sized activations hit this path by default).
    out = differentiable_quantize_fwd(x, force_pallas=True)
    out = jax.block_until_ready(out)
    ref = jnp.round(x)
    assert out.shape == x.shape and out.dtype == x.dtype
    assert jnp.array_equal(out, ref)

    # 2) Round-half-to-even edge cases through the Pallas path.
    edges = jnp.array([0.5, 1.5, 2.5, -0.5, -1.5, -2.5, 3.3, -3.7], dtype=jnp.float32)
    out_e = jax.block_until_ready(differentiable_quantize_fwd(edges, force_pallas=True))
    assert jnp.array_equal(out_e, jnp.round(edges))

    # 3) A larger, tile-spanning input (multiple grid steps, f32 tile = (512,1024)).
    xl = jax.random.uniform(jax.random.PRNGKey(1), (4, 3, 256, 384),
                            dtype=jnp.float32, minval=-255.0, maxval=255.0)
    out_l = jax.block_until_ready(differentiable_quantize_fwd(xl, force_pallas=True))
    assert jnp.array_equal(out_l, jnp.round(xl))

    # 4) Public API (threshold fallback for tiny inputs) + straight-through grad.
    out_api = jax.block_until_ready(differentiable_quantize(x))
    assert jnp.array_equal(out_api, ref)
    g = jax.grad(lambda a: jnp.sum(differentiable_quantize(a)))(x)
    g = jax.block_until_ready(g)
    assert jnp.array_equal(g, jnp.ones_like(x))

    print("KERNEL_OK")
</pallas_src>

<mosaic_0001>
module attributes {stable_mosaic.version = 11 : i64} {
  func.func @_round_kernel(%arg0: i32, %arg1: memref<16x1024xf32, #tpu.memory_space<vmem>>, %arg2: memref<16x1024xf32, #tpu.memory_space<vmem>>) attributes {dimension_semantics = [#tpu.dimension_semantics<parallel>], iteration_bounds = array<i64: 1>, scalar_prefetch = 0 : i64, scratch_operands = 0 : i64, tpu.core_type = #tpu.core_type<tc>, window_params = [{transform_indices = @transform_0, window_bounds = array<i64: 16, 1024>}, {transform_indices = @transform_1, window_bounds = array<i64: 16, 1024>}]} {
    %c0 = arith.constant 0 : index
    %c0_0 = arith.constant 0 : index
    %0 = vector.load %arg1[%c0, %c0_0] : memref<16x1024xf32, #tpu.memory_space<vmem>>, vector<16x1024xf32>
    %1 = math.roundeven %0 : vector<16x1024xf32>
    %c0_1 = arith.constant 0 : index
    %c0_2 = arith.constant 0 : index
    %2 = vector.load %arg2[%c0_1, %c0_2] : memref<16x1024xf32, #tpu.memory_space<vmem>>, vector<16x1024xf32>
    tpu.vector_store %arg2[%c0_1, %c0_2], %1 {strides = array<i32>} : memref<16x1024xf32, #tpu.memory_space<vmem>>, vector<16x1024xf32>,
    return
  }
  func.func @transform_0(%arg0: i32) -> (i32, i32) {
    %c0_i32 = arith.constant 0 : i32
    %c0_i32_0 = arith.constant 0 : i32
    return %arg0, %c0_i32 : i32, i32
  }
  func.func @transform_1(%arg0: i32) -> (i32, i32) {
    %c0_i32 = arith.constant 0 : i32
    %c0_i32_0 = arith.constant 0 : i32
    return %arg0, %c0_i32 : i32, i32
  }
}

</mosaic_0001>

<llo_original>
// kernel: tpu_custom_call.1
$region0: #{tpu_custom_call.1}
  #allocation0 [shape = 'u32[]', space=smem, size = 0x4, offset = 0x4, fixed_abs, tag = 'smem constant byte address 0x4 - core index']
  #allocation1 [shape = 'u32[72,128]{1,0:T(1,128)}', space=vmem, size = 0x9000, scoped, tag = 'internal scratch']
  %s0 = inlined_call_operand.hbm [shape: f32[16,1024], index: 0, kind: input, shape index: {}, may-alias: {0,1}]
  %s1 = inlined_call_operand.hbm [shape: f32[16,1024], index: 1, kind: output, shape index: {}, may-alias: {0,1}]
  %s2 = sld [smem:[#allocation0]]
  $region18: #{tpu_custom_call.1} parent=0
    _
  %s4 = ssub.s32 1, %s2
  %s5 = scalar_select 0, %s4, %s2
  $region1: #{tpu_custom_call.1} parent=0
    #allocation2 [shape = 'u8[65536]{0}', space=vmem, size = 0x10000, scoped, tag = 'input window, operand 0, single buffered']
    #allocation3 [shape = 's32[1]{0}', space=sflag, size = 0x4, scoped, tag = 'scoped memory for tpu_custom_call.1']
    #allocation4 [shape = 's32[1]{0}', space=sflag, size = 0x4, scoped, tag = 'scoped memory for tpu_custom_call.1']
    #allocation5 [shape = 'u8[65536]{0}', space=vmem, size = 0x10000, scoped, tag = 'output window, operand 0, single buffered']
    %6 = vsyncpa [#allocation3], 0
    %7 = vsyncpa [#allocation4], 0
    // Predicated region
    $region2: #{tpu_custom_call.1} parent=1 // pred_check
      _
    $region3: #{tpu_custom_call.1} parent=1 // pred_check_branch
      %9 = sbr.rel (0) target = $region5
    $region4: #{tpu_custom_call.1} parent=1 // pred_region
      %11 = vsyncadd [#allocation3], 0
      %s12 = sshll.u32 %s0, 4
      %s13 = int_to_ptr.hbm [resolvable:$true] %s12
      %s14 = sshll.u32 [#allocation2], 4
      %s15 = int_to_ptr.vmem [resolvable:$true] %s14
      %20 = dma.hbm_to_vmem [thread:$0]  %s13, 2048, %s15, [#allocation3], 1024, 1024, 64
    $region5: #{tpu_custom_call.1} parent=1 // pred_fallthru
      _
    // Predicated region
    $region6: #{tpu_custom_call.1} parent=1 // pred_check
      _
    $region7: #{tpu_custom_call.1} parent=1 // pred_check_branch
      %22 = sbr.rel (0) target = $region9
    $region8: #{tpu_custom_call.1} parent=1 // pred_region
      %24 = dma.done [#allocation3], 2048
    $region9: #{tpu_custom_call.1} parent=1 // pred_fallthru
      _
    %v25 = vld [vmem:[#allocation2] sm:$0xff]
    %v26 = vld [vmem:[#allocation2 + $0x8] sm:$0xff]
    %v27 = vld [vmem:[#allocation2 + $0x10] sm:$0xff]
    %v28 = vld [vmem:[#allocation2 + $0x18] sm:$0xff]
    %v29 = vld [vmem:[#allocation2 + $0x20] sm:$0xff]
    %v30 = vld [vmem:[#allocation2 + $0x28] sm:$0xff]
    %v31 = vld [vmem:[#allocation2 + $0x30] sm:$0xff]
    %v32 = vld [vmem:[#allocation2 + $0x38] sm:$0xff]
    %v33 = vld [vmem:[#allocation2 + $0x40] sm:$0xff]
    %v34 = vld [vmem:[#allocation2 + $0x48] sm:$0xff]
    %v35 = vld [vmem:[#allocation2 + $0x50] sm:$0xff]
    %v36 = vld [vmem:[#allocation2 + $0x58] sm:$0xff]
    %v37 = vld [vmem:[#allocation2 + $0x60] sm:$0xff]
    %v38 = vld [vmem:[#allocation2 + $0x68] sm:$0xff]
    %v39 = vld [vmem:[#allocation2 + $0x70] sm:$0xff]
    %v40 = vld [vmem:[#allocation2 + $0x78] sm:$0xff]
    %v41 = vround.ne.pseudo %v25
    %v42 = vround.ne.pseudo %v26
    %v43 = vround.ne.pseudo %v27
    %v44 = vround.ne.pseudo %v28
    %v45 = vround.ne.pseudo %v29
    %v46 = vround.ne.pseudo %v30
    %v47 = vround.ne.pseudo %v31
    %v48 = vround.ne.pseudo %v32
    %v49 = vround.ne.pseudo %v33
    %v50 = vround.ne.pseudo %v34
    %v51 = vround.ne.pseudo %v35
    %v52 = vround.ne.pseudo %v36
    %v53 = vround.ne.pseudo %v37
    %v54 = vround.ne.pseudo %v38
    %v55 = vround.ne.pseudo %v39
    %v56 = vround.ne.pseudo %v40
    %57 = vst [vmem:[#allocation5] sm:$0xff] %v41
    %58 = vst [vmem:[#allocation5 + $0x8] sm:$0xff] %v42
    %59 = vst [vmem:[#allocation5 + $0x10] sm:$0xff] %v43
    %60 = vst [vmem:[#allocation5 + $0x18] sm:$0xff] %v44
    %61 = vst [vmem:[#allocation5 + $0x20] sm:$0xff] %v45
    %62 = vst [vmem:[#allocation5 + $0x28] sm:$0xff] %v46
    %63 = vst [vmem:[#allocation5 + $0x30] sm:$0xff] %v47
    %64 = vst [vmem:[#allocation5 + $0x38] sm:$0xff] %v48
    %65 = vst [vmem:[#allocation5 + $0x40] sm:$0xff] %v49
    %66 = vst [vmem:[#allocation5 + $0x48] sm:$0xff] %v50
    %67 = vst [vmem:[#allocation5 + $0x50] sm:$0xff] %v51
    %68 = vst [vmem:[#allocation5 + $0x58] sm:$0xff] %v52
    %69 = vst [vmem:[#allocation5 + $0x60] sm:$0xff] %v53
    %70 = vst [vmem:[#allocation5 + $0x68] sm:$0xff] %v54
    %71 = vst [vmem:[#allocation5 + $0x70] sm:$0xff] %v55
    %72 = vst [vmem:[#allocation5 + $0x78] sm:$0xff] %v56
    // Predicated region
    $region10: #{tpu_custom_call.1} parent=1 // pred_check
      _
    $region11: #{tpu_custom_call.1} parent=1 // pred_check_branch
      %74 = sbr.rel (0) target = $region13
    $region12: #{tpu_custom_call.1} parent=1 // pred_region
      %76 = vsyncadd [#allocation4], 0
      %s77 = sshll.u32 [#allocation5], 4
      %s78 = int_to_ptr.vmem [resolvable:$true] %s77
      %s79 = sshll.u32 %s1, 4
      %s80 = int_to_ptr.hbm [resolvable:$true] %s79
      %85 = dma.vmem_to_hbm [thread:$0]  %s78, 2048, %s80, [#allocation4], 1024, 1024, 64
    $region13: #{tpu_custom_call.1} parent=1 // pred_fallthru
      _
    // Predicated region
    $region14: #{tpu_custom_call.1} parent=1 // pred_check
      _
    $region15: #{tpu_custom_call.1} parent=1 // pred_check_branch
      %87 = sbr.rel (0) target = $region17
    $region16: #{tpu_custom_call.1} parent=1 // pred_region
      %89 = dma.done [#allocation4], 2048
    $region17: #{tpu_custom_call.1} parent=1 // pred_fallthru
      _
    %90 = vsyncpa [#allocation3], 1
    %91 = vsyncpa [#allocation4], 1

</llo_original>
